<compile_context>
chip_gen: v5e
topology: v5e:2x2
jax: 0.10.0
libtpu: 0.0.40
codegen_flags: <defaults>
</compile_context>

<pallas_src>
import functools

import jax
import jax.numpy as jnp
from jax import lax
from jax.experimental import pallas as pl
from jax.experimental.pallas import tpu as pltpu

NEG_SLOPE = 0.1   # the module uses nn.LeakyReLU(0.1)
LN_EPS = 1e-5     # nn.LayerNorm default


def _leaky_relu(x):
    return jnp.where(x >= 0, x, NEG_SLOPE * x)


def _layer_norm(x, gamma, beta):
    mu = jnp.mean(x, axis=-1, keepdims=True)
    xc = x - mu
    var = jnp.mean(xc * xc, axis=-1, keepdims=True)
    return xc * lax.rsqrt(var + LN_EPS) * gamma + beta


def _gelu(x):
    # TODO(synk): PyTorch F.gelu is erf-exact; the tanh approximation is used
    # here (tanh lowers to the EUP on all TPU gens), |diff| < 1e-3.
    c = 0.7978845608028654  # sqrt(2/pi)
    return 0.5 * x * (1.0 + jnp.tanh(c * (x + 0.044715 * x * x * x)))


# ---------------------------------------------------------------------------
# 1) conv1d_resnet stem (stand-in) + LeakyReLU(0.1)
# ---------------------------------------------------------------------------
def stem_conv_kernel(kernel_size, x_ref, w_ref, o_ref):
    """'same' Conv1d (no bias; stem_conv_bias=False) + LeakyReLU(0.1)."""
    L = o_ref.shape[1]
    x = x_ref[0]                                    # [L + K - 1, C_in]
    acc = jnp.zeros(o_ref.shape[1:], jnp.float32)   # [L, F_res]
    for k in range(kernel_size):                    # static unroll over taps
        acc = acc + jnp.dot(x[k:k + L, :], w_ref[k],
                            preferred_element_type=jnp.float32)
    o_ref[0] = _leaky_relu(acc).astype(o_ref.dtype)


def stem_conv_leaky(x, stem_w):
    """x: [B, C_in, L]  ->  [B, L, F_res] (channels-last)."""
    B, C_in, L = x.shape
    F, _, K = stem_w.shape
    pad_l = (K - 1) // 2
    pad_r = K - 1 - pad_l
    x_cl = jnp.pad(jnp.transpose(x, (0, 2, 1)),
                   ((0, 0), (pad_l, pad_r), (0, 0)))         # [B, L+K-1, C_in]
    w_t = jnp.transpose(stem_w, (2, 1, 0))                   # [K, C_in, F]
    return pl.pallas_call(
        functools.partial(stem_conv_kernel, K),
        out_shape=jax.ShapeDtypeStruct((B, L, F), x.dtype),
        grid=(B,),
        in_specs=[
            pl.BlockSpec((1, L + K - 1, C_in), lambda b: (b, 0, 0)),
            pl.BlockSpec((K, C_in, F), lambda b: (0, 0, 0)),
        ],
        out_specs=pl.BlockSpec((1, L, F), lambda b: (b, 0, 0)),
        compiler_params=pltpu.CompilerParams(
            dimension_semantics=("parallel",)),
    )(x_cl, w_t)


# ---------------------------------------------------------------------------
# 2+3) conv_patch_cutter + LeakyReLU(0.1) + positional embeddings
#      (stride == kernel_size -> non-overlapping patches -> one matmul)
# ---------------------------------------------------------------------------
def patch_embed_kernel(x_ref, w_ref, b_ref, pos_ref, o_ref):
    y = jnp.dot(x_ref[0], w_ref[...],
                preferred_element_type=jnp.float32) + b_ref[...]
    o_ref[0] = (_leaky_relu(y) + pos_ref[...]).astype(o_ref.dtype)


def patch_embed(h, patch_w, patch_b, pos, patch_size):
    """h: [B, L, F_res] -> [B, S, D] (already in 'b h f' order)."""
    B, L, F_res = h.shape
    D = patch_w.shape[0]
    P = patch_size
    S = L // P
    h_p = h[:, :S * P, :].reshape(B, S, P * F_res)
    # W_flat[p*F_res + c, d] == patch_w[d, c, p] (matches the patch layout)
    w_flat = jnp.transpose(patch_w, (2, 1, 0)).reshape(P * F_res, D)
    b_row = patch_b.reshape(1, D)
    return pl.pallas_call(
        patch_embed_kernel,
        out_shape=jax.ShapeDtypeStruct((B, S, D), h.dtype),
        grid=(B,),
        in_specs=[
            pl.BlockSpec((1, S, P * F_res), lambda b: (b, 0, 0)),
            pl.BlockSpec((P * F_res, D), lambda b: (0, 0)),
            pl.BlockSpec((1, D), lambda b: (0, 0)),
            pl.BlockSpec((S, D), lambda b: (0, 0)),
        ],
        out_specs=pl.BlockSpec((1, S, D), lambda b: (b, 0, 0)),
        compiler_params=pltpu.CompilerParams(
            dimension_semantics=("parallel",)),
    )(h_p, w_flat, b_row, pos)


# ---------------------------------------------------------------------------
# 4) pre-norm TransformerEncoder stack (single fused pallas_call)
# ---------------------------------------------------------------------------
def encoder_stack_kernel(num_heads,
                         x_ref, wqkv_ref, bqkv_ref, wo_ref, bo_ref,
                         w1_ref, b1_ref, w2_ref, b2_ref,
                         g1_ref, be1_ref, g2_ref, be2_ref,
                         o_ref, resid_ref):
    """One pre-norm TransformerEncoderLayer per inner-grid step; the residual
    stream stays resident in VMEM scratch across the layer axis."""
    layer = pl.program_id(1)

    @pl.when(layer == 0)
    def _():
        resid_ref[...] = x_ref[0].astype(jnp.float32)

    x = resid_ref[...]                              # [S, D] f32 residual stream
    S, D = x.shape
    head_dim = D // num_heads
    scale = 1.0 / head_dim ** 0.5

    # --- self-attention block (norm_first) ---
    h = _layer_norm(x, g1_ref[0], be1_ref[0])
    qkv = jnp.dot(h, wqkv_ref[0],
                  preferred_element_type=jnp.float32) + bqkv_ref[0]
    q, k, v = qkv[:, :D], qkv[:, D:2 * D], qkv[:, 2 * D:]
    ctx = []
    for hi in range(num_heads):                     # static unroll over heads
        sl = slice(hi * head_dim, (hi + 1) * head_dim)
        s = jnp.einsum("qd,kd->qk", q[:, sl], k[:, sl],
                       preferred_element_type=jnp.float32) * scale
        s = s - jnp.max(s, axis=-1, keepdims=True)
        p = jnp.exp(s)
        p = p / jnp.sum(p, axis=-1, keepdims=True)
        ctx.append(jnp.dot(p, v[:, sl], preferred_element_type=jnp.float32))
    ctx = jnp.concatenate(ctx, axis=-1)             # [S, D]
    x = x + jnp.dot(ctx, wo_ref[0],
                    preferred_element_type=jnp.float32) + bo_ref[0]

    # --- feed-forward block (norm_first) ---
    h2 = _layer_norm(x, g2_ref[0], be2_ref[0])
    ff = _gelu(jnp.dot(h2, w1_ref[0],
                       preferred_element_type=jnp.float32) + b1_ref[0])
    x = x + jnp.dot(ff, w2_ref[0],
                    preferred_element_type=jnp.float32) + b2_ref[0]

    resid_ref[...] = x

    @pl.when(layer == pl.num_programs(1) - 1)
    def _():
        o_ref[0] = resid_ref[...].astype(o_ref.dtype)


_LAYER_PARAM_ORDER = ("wqkv", "bqkv", "wo", "bo", "w1", "b1", "w2", "b2",
                      "g1", "be1", "g2", "be2")


def transformer_encoder(x, layer_params, num_heads):
    """x: [B, S, D]; layer_params: per-layer weights stacked on a leading axis."""
    B, S, D = x.shape
    num_layers = layer_params["wqkv"].shape[0]

    in_specs = [pl.BlockSpec((1, S, D), lambda b, l: (b, 0, 0))]
    args = [x]
    for name in _LAYER_PARAM_ORDER:
        p = layer_params[name]
        in_specs.append(pl.BlockSpec((1,) + p.shape[1:],
                                     lambda b, l: (l, 0, 0)))
        args.append(p)

    return pl.pallas_call(
        functools.partial(encoder_stack_kernel, num_heads),
        out_shape=jax.ShapeDtypeStruct((B, S, D), x.dtype),
        grid=(B, num_layers),
        in_specs=in_specs,
        out_specs=pl.BlockSpec((1, S, D), lambda b, l: (b, 0, 0)),
        scratch_shapes=[pltpu.VMEM((S, D), jnp.float32)],
        compiler_params=pltpu.CompilerParams(
            dimension_semantics=("parallel", "arbitrary")),
    )(*args)


# ---------------------------------------------------------------------------
# Full forward
# ---------------------------------------------------------------------------
def conv1d_transformer_forward(x, params, cfg):
    # 1) conv1d_resnet stem + LeakyReLU(0.1).
    # TODO(synk): ConvNetEmbedding internals (ConvPool1DStemBlock / ResNetBlock1D
    # stages) are not defined in the spec; a single 'same' stem Conv1d
    # (stem_conv_bias=False) + LeakyReLU is implemented as a stand-in.
    h = stem_conv_leaky(x, params["stem_w"])                        # [B, L, F]
    # 2+3) patch cutter + LeakyReLU, 'b f h -> b h f' and pos-emb add (fused).
    y = patch_embed(h, params["patch_w"], params["patch_b"],
                    params["pos"], cfg["grid_patch_size"])          # [B, S, D]
    # 4) pre-norm transformer encoder stack.
    y = transformer_encoder(y, params["layers"],
                            cfg["transformer_num_heads"])           # [B, S, D]
    # 5) optional sequence-index selection (pure indexing, done in the wrapper).
    if cfg.get("return_sequence_idx") is not None:
        y = y[:, cfg["return_sequence_idx"], :]
    return y


# ---------------------------------------------------------------------------
# Parameters (deterministic, PyTorch-like init; weights stored (in, out))
# ---------------------------------------------------------------------------
def _uniform(key, shape, bound, dtype):
    return jax.random.uniform(key, shape, dtype, minval=-bound, maxval=bound)


def init_params(key, cfg, in_channels, num_patches, dtype=jnp.float32):
    D = cfg["transformer_num_filters"]
    F = cfg["resnet_num_filters"]
    K = cfg["resnet_kernel_size"]
    P = cfg["grid_patch_size"]
    FF = cfg["transformer_dim_feedforward"]
    NL = cfg["transformer_num_layers"]

    k_stem, k_pw, k_pb, k_pos, k_layers = jax.random.split(key, 5)
    params = {
        # PyTorch Conv1d layouts (out, in, kernel); stem has no bias.
        "stem_w": _uniform(k_stem, (F, in_channels, K),
                           1.0 / (in_channels * K) ** 0.5, dtype),
        "patch_w": _uniform(k_pw, (D, F, P), 1.0 / (F * P) ** 0.5, dtype),
        "patch_b": _uniform(k_pb, (D,), 1.0 / (F * P) ** 0.5, dtype),
        "pos": jax.random.normal(k_pos, (num_patches, D), dtype),
    }

    layers = {n: [] for n in _LAYER_PARAM_ORDER}
    bd = 1.0 / D ** 0.5
    bff = 1.0 / FF ** 0.5
    for l in range(NL):
        ks = jax.random.split(jax.random.fold_in(k_layers, l), 8)
        layers["wqkv"].append(_uniform(ks[0], (D, 3 * D), bd, dtype))
        layers["bqkv"].append(_uniform(ks[1], (1, 3 * D), bd, dtype))
        layers["wo"].append(_uniform(ks[2], (D, D), bd, dtype))
        layers["bo"].append(_uniform(ks[3], (1, D), bd, dtype))
        layers["w1"].append(_uniform(ks[4], (D, FF), bd, dtype))
        layers["b1"].append(_uniform(ks[5], (1, FF), bd, dtype))
        layers["w2"].append(_uniform(ks[6], (FF, D), bff, dtype))
        layers["b2"].append(_uniform(ks[7], (1, D), bff, dtype))
        layers["g1"].append(jnp.ones((1, D), dtype))
        layers["be1"].append(jnp.zeros((1, D), dtype))
        layers["g2"].append(jnp.ones((1, D), dtype))
        layers["be2"].append(jnp.zeros((1, D), dtype))
    params["layers"] = {n: jnp.stack(v, axis=0) for n, v in layers.items()}
    return params


# ---------------------------------------------------------------------------
# Pure-JAX reference (same math / same weight layouts)
# ---------------------------------------------------------------------------
def conv1d_transformer_reference(x, params, cfg):
    B, C_in, L = x.shape
    K = cfg["resnet_kernel_size"]
    P = cfg["grid_patch_size"]
    H = cfg["transformer_num_heads"]

    pad_l = (K - 1) // 2
    pad_r = K - 1 - pad_l
    x_cl = jnp.pad(jnp.transpose(x, (0, 2, 1)),
                   ((0, 0), (pad_l, pad_r), (0, 0)))
    w_t = jnp.transpose(params["stem_w"], (2, 1, 0))
    h = sum(jnp.einsum("blc,cf->blf", x_cl[:, k:k + L, :], w_t[k])
            for k in range(K))
    h = _leaky_relu(h)                                          # [B, L, F]

    F_res = h.shape[-1]
    S = L // P
    hp = h[:, :S * P, :].reshape(B, S, P * F_res)
    D = params["patch_w"].shape[0]
    w_flat = jnp.transpose(params["patch_w"], (2, 1, 0)).reshape(P * F_res, D)
    y = _leaky_relu(hp @ w_flat + params["patch_b"][None, None, :])
    y = y + params["pos"][None]                                 # [B, S, D]

    lp = params["layers"]
    num_layers = lp["wqkv"].shape[0]
    hd = D // H
    for l in range(num_layers):
        h1 = _layer_norm(y, lp["g1"][l], lp["be1"][l])
        qkv = h1 @ lp["wqkv"][l] + lp["bqkv"][l]
        q, k_, v = qkv[..., :D], qkv[..., D:2 * D], qkv[..., 2 * D:]
        q = q.reshape(B, S, H, hd)
        k_ = k_.reshape(B, S, H, hd)
        v = v.reshape(B, S, H, hd)
        s = jnp.einsum("bqhd,bkhd->bhqk", q, k_) * (1.0 / hd ** 0.5)
        p = jax.nn.softmax(s, axis=-1)
        ctx = jnp.einsum("bhqk,bkhd->bqhd", p, v).reshape(B, S, D)
        y = y + (ctx @ lp["wo"][l] + lp["bo"][l])
        h2 = _layer_norm(y, lp["g2"][l], lp["be2"][l])
        ff = _gelu(h2 @ lp["w1"][l] + lp["b1"][l])
        y = y + (ff @ lp["w2"][l] + lp["b2"][l])

    if cfg.get("return_sequence_idx") is not None:
        y = y[:, cfg["return_sequence_idx"], :]
    return y


if __name__ == "__main__":
    cfg = dict(
        grid_patch_size=8,
        resnet_num_filters=32,
        resnet_kernel_size=3,
        transformer_num_filters=128,    # d_model kept lane-dense (x128)
        transformer_num_layers=2,
        transformer_num_heads=4,
        transformer_dim_feedforward=256,
        return_sequence_idx=0,
    )
    B, C_in, L = 2, 4, 64
    S = L // cfg["grid_patch_size"]

    key = jax.random.PRNGKey(0)
    kx, kp = jax.random.split(key)
    x = jax.random.normal(kx, (B, C_in, L), dtype=jnp.float32)
    params = init_params(kp, cfg, in_channels=C_in, num_patches=S)

    out = conv1d_transformer_forward(x, params, cfg)
    out = jax.block_until_ready(out)

    ref = conv1d_transformer_reference(x, params, cfg)
    assert out.shape == (B, cfg["transformer_num_filters"]), out.shape
    assert jnp.allclose(out, ref, atol=2e-2, rtol=2e-2), (
        "mismatch vs reference: max abs err "
        f"{float(jnp.max(jnp.abs(out - ref)))}")
    print("KERNEL_OK")
</pallas_src>

<mosaic_0001>
module attributes {stable_mosaic.version = 11 : i64} {
  func.func @stem_conv_kernel(%arg0: i32, %arg1: memref<1x66x4xf32, #tpu.memory_space<vmem>>, %arg2: memref<3x4x32xf32, #tpu.memory_space<vmem>>, %arg3: memref<1x64x32xf32, #tpu.memory_space<vmem>>) attributes {dimension_semantics = [#tpu.dimension_semantics<parallel>], iteration_bounds = array<i64: 2>, scalar_prefetch = 0 : i64, scratch_operands = 0 : i64, tpu.core_type = #tpu.core_type<tc>, window_params = [{transform_indices = @transform_0, window_bounds = array<i64: 1, 66, 4>}, {pipeline_mode = #tpu.pipeline_mode<synchronous>, transform_indices = @transform_1, window_bounds = array<i64: 3, 4, 32>}, {transform_indices = @transform_2, window_bounds = array<i64: 1, 64, 32>}]} {
    %c0 = arith.constant 0 : index
    %c0_0 = arith.constant 0 : index
    %c0_1 = arith.constant 0 : index
    %0 = vector.load %arg1[%c0, %c0_0, %c0_1] : memref<1x66x4xf32, #tpu.memory_space<vmem>>, vector<1x66x4xf32>
    %1 = vector.shape_cast %0 : vector<1x66x4xf32> to vector<66x4xf32>
    %cst = arith.constant 0.000000e+00 : f32
    %2 = vector.broadcast %cst : f32 to vector<64x32xf32>
    %3 = vector.extract_strided_slice %1 {offsets = [0, 0], sizes = [64, 4], strides = [1, 1]} : vector<66x4xf32> to vector<64x4xf32>
    %c0_2 = arith.constant 0 : index
    %c0_3 = arith.constant 0 : index
    %c0_4 = arith.constant 0 : index
    %4 = vector.load %arg2[%c0_2, %c0_3, %c0_4] : memref<3x4x32xf32, #tpu.memory_space<vmem>>, vector<1x4x32xf32>
    %5 = vector.shape_cast %4 : vector<1x4x32xf32> to vector<4x32xf32>
    %cst_5 = arith.constant dense<0.000000e+00> : vector<64x32xf32>
    %6 = tpu.matmul %3, %5, %cst_5 {dimension_numbers = #tpu.dot_dimension_numbers<[1], [0], [0], [1], [0, 0, 1, 1], [], []>} : vector<64x4xf32>, vector<4x32xf32>, vector<64x32xf32> -> vector<64x32xf32>
    %7 = arith.addf %2, %6 : vector<64x32xf32>
    %8 = vector.extract_strided_slice %1 {offsets = [1, 0], sizes = [64, 4], strides = [1, 1]} : vector<66x4xf32> to vector<64x4xf32>
    %c1 = arith.constant 1 : index
    %c0_6 = arith.constant 0 : index
    %c0_7 = arith.constant 0 : index
    %9 = vector.load %arg2[%c1, %c0_6, %c0_7] : memref<3x4x32xf32, #tpu.memory_space<vmem>>, vector<1x4x32xf32>
    %10 = vector.shape_cast %9 : vector<1x4x32xf32> to vector<4x32xf32>
    %cst_8 = arith.constant dense<0.000000e+00> : vector<64x32xf32>
    %11 = tpu.matmul %8, %10, %cst_8 {dimension_numbers = #tpu.dot_dimension_numbers<[1], [0], [0], [1], [0, 0, 1, 1], [], []>} : vector<64x4xf32>, vector<4x32xf32>, vector<64x32xf32> -> vector<64x32xf32>
    %12 = arith.addf %7, %11 : vector<64x32xf32>
    %13 = vector.extract_strided_slice %1 {offsets = [2, 0], sizes = [64, 4], strides = [1, 1]} : vector<66x4xf32> to vector<64x4xf32>
    %c2 = arith.constant 2 : index
    %c0_9 = arith.constant 0 : index
    %c0_10 = arith.constant 0 : index
    %14 = vector.load %arg2[%c2, %c0_9, %c0_10] : memref<3x4x32xf32, #tpu.memory_space<vmem>>, vector<1x4x32xf32>
    %15 = vector.shape_cast %14 : vector<1x4x32xf32> to vector<4x32xf32>
    %cst_11 = arith.constant dense<0.000000e+00> : vector<64x32xf32>
    %16 = tpu.matmul %13, %15, %cst_11 {dimension_numbers = #tpu.dot_dimension_numbers<[1], [0], [0], [1], [0, 0, 1, 1], [], []>} : vector<64x4xf32>, vector<4x32xf32>, vector<64x32xf32> -> vector<64x32xf32>
    %17 = arith.addf %12, %16 : vector<64x32xf32>
    %cst_12 = arith.constant 0.000000e+00 : f32
    %18 = vector.broadcast %cst_12 : f32 to vector<64x32xf32>
    %19 = arith.cmpf oge, %17, %18 : vector<64x32xf32>
    %cst_13 = arith.constant 1.000000e-01 : f32
    %20 = vector.broadcast %cst_13 : f32 to vector<64x32xf32>
    %21 = arith.mulf %20, %17 : vector<64x32xf32>
    %22 = arith.select %19, %17, %21 : vector<64x32xi1>, vector<64x32xf32>
    %c0_14 = arith.constant 0 : index
    %c0_15 = arith.constant 0 : index
    %c0_16 = arith.constant 0 : index
    %23 = vector.load %arg3[%c0_14, %c0_15, %c0_16] : memref<1x64x32xf32, #tpu.memory_space<vmem>>, vector<1x64x32xf32>
    %24 = vector.shape_cast %23 : vector<1x64x32xf32> to vector<64x32xf32>
    %25 = vector.shape_cast %22 : vector<64x32xf32> to vector<1x64x32xf32>
    tpu.vector_store %arg3[%c0_14, %c0_15, %c0_16], %25 {strides = array<i32>} : memref<1x64x32xf32, #tpu.memory_space<vmem>>, vector<1x64x32xf32>,
    return
  }
  func.func @transform_0(%arg0: i32) -> (i32, i32, i32) {
    %c0_i32 = arith.constant 0 : i32
    %c0_i32_0 = arith.constant 0 : i32
    %c0_i32_1 = arith.constant 0 : i32
    return %arg0, %c0_i32, %c0_i32_0 : i32, i32, i32
  }
  func.func @transform_1(%arg0: i32) -> (i32, i32, i32) {
    %c0_i32 = arith.constant 0 : i32
    %c0_i32_0 = arith.constant 0 : i32
    %c0_i32_1 = arith.constant 0 : i32
    %c0_i32_2 = arith.constant 0 : i32
    return %c0_i32, %c0_i32_0, %c0_i32_1 : i32, i32, i32
  }
  func.func @transform_2(%arg0: i32) -> (i32, i32, i32) {
    %c0_i32 = arith.constant 0 : i32
    %c0_i32_0 = arith.constant 0 : i32
    %c0_i32_1 = arith.constant 0 : i32
    return %arg0, %c0_i32, %c0_i32_0 : i32, i32, i32
  }
}

</mosaic_0001>

<llo_original>
// kernel: tpu_custom_call.1
$region0: #{tpu_custom_call.1}
  #allocation0 [shape = 'u32[]', space=smem, size = 0x4, offset = 0x4, fixed_abs, tag = 'smem constant byte address 0x4 - core index']
  #allocation1 [shape = 'u32[72,128]{1,0:T(1,128)}', space=vmem, size = 0x9000, scoped, tag = 'internal scratch']
  %s0 = inlined_call_operand.vmem [shape: f32[2,66,4], index: 0, kind: input, shape index: {}]
  %s1 = inlined_call_operand.vmem [shape: f32[3,4,32], index: 1, kind: input, shape index: {}]
  %s2 = inlined_call_operand.vmem [shape: f32[2,64,32], index: 2, kind: output, shape index: {}]
  %s3 = sld [smem:[#allocation0]]
  $region41: #{tpu_custom_call.1} parent=0
    _
  %s5 = ssub.s32 1, %s3
  %s6 = scalar_select 0, %s5, %s3
  loop: start=0, step=1, limit=4
  $region2: #{tpu_custom_call.1} parent=0 // loop_pre_header
    _
  $region3: #{tpu_custom_call.1} parent=0 // loop_header
    %s8 = sphi 0, %s12
    %p9 = scmp.ge.s32.totalorder %s8, 4
    %s18 = sphi 0, %s20
    %s21 = sphi 0, %s18
    %s22 = sphi 0, %s21
    %s38 = sphi 0, %s22
    %s42 = sphi 0, %s42
    %s44 = sphi 0, %s42
    %s45 = sphi 0, %s44
    %s59 = sphi 0, %s45
    %s65 = sphi 0, %s67
    %s68 = sphi 0, %s65
    %s69 = sphi 0, %s68
    %s85 = sphi 0, %s69
  $region4: #{tpu_custom_call.1} parent=0 // loop_header_branch
    %11 = sbr.rel (%p9) target = $region8
  $region5: #{tpu_custom_call.1} parent=0 // loop_body
    %s13 = ssub.s32 %s8, 1
    %s14 = ssub.s32 %s8, 2
    %s15 = sadd.s32 %s8, 1
    %s16 = ssub.s32 %s8, %s15
    %p17 = scmp.eq.s32.totalorder %s16, 0
    %s19 = sadd.s32 %s18, 1
    %s20 = scalar_select %p17, %s18, %s19
    %p23 = pneg %p17
    %p24 = scmp.eq.s32.totalorder %s8, 1
    %p25 = por %p23, %p24
    %p26 = scmp.ne.s32.totalorder %s18, %s21
    %p27 = scmp.eq.s32.totalorder %s8, 0
    %p28 = por %p26, %p27
    %p29 = scmp.ne.s32.totalorder %s18, %s21
    %p30 = scmp.eq.s32.totalorder %s13, 1
    %p31 = por %p29, %p30
    %p32 = scmp.ne.s32.totalorder %s21, %s22
    %p33 = scmp.eq.s32.totalorder %s13, 0
    %p34 = por %p32, %p33
    %p35 = scmp.ne.s32.totalorder %s21, %s22
    %p36 = scmp.eq.s32.totalorder %s14, 1
    %p37 = por %p35, %p36
    %p39 = scmp.ne.s32.totalorder %s22, %s38
    %p40 = scmp.eq.s32.totalorder %s14, 0
    %p41 = por %p39, %p40
    %s43 = sadd.s32 %s42, 1
    %p46 = scmp.eq.s32.totalorder %s8, 1
    %p47 = scmp.ne.s32.totalorder %s42, %s44
    %p48 = scmp.eq.s32.totalorder %s8, 0
    %p49 = por %p47, %p48
    %p50 = scmp.ne.s32.totalorder %s42, %s44
    %p51 = scmp.eq.s32.totalorder %s13, 1
    %p52 = por %p50, %p51
    %p53 = scmp.ne.s32.totalorder %s44, %s45
    %p54 = scmp.eq.s32.totalorder %s13, 0
    %p55 = por %p53, %p54
    %p56 = scmp.ne.s32.totalorder %s44, %s45
    %p57 = scmp.eq.s32.totalorder %s14, 1
    %p58 = por %p56, %p57
    %p60 = scmp.ne.s32.totalorder %s45, %s59
    %p61 = scmp.eq.s32.totalorder %s14, 0
    %p62 = por %p60, %p61
    %s63 = ssub.s32 %s8, %s15
    %p64 = scmp.eq.s32.totalorder %s63, 0
    %s66 = sadd.s32 %s65, 1
    %s67 = scalar_select %p64, %s65, %s66
    %p70 = pneg %p64
    %p71 = scmp.eq.s32.totalorder %s8, 1
    %p72 = por %p70, %p71
    %p73 = scmp.ne.s32.totalorder %s65, %s68
    %p74 = scmp.eq.s32.totalorder %s8, 0
    %p75 = por %p73, %p74
    %p76 = scmp.ne.s32.totalorder %s65, %s68
    %p77 = scmp.eq.s32.totalorder %s13, 1
    %p78 = por %p76, %p77
    %p79 = scmp.ne.s32.totalorder %s68, %s69
    %p80 = scmp.eq.s32.totalorder %s13, 0
    %p81 = por %p79, %p80
    %p82 = scmp.ne.s32.totalorder %s68, %s69
    %p83 = scmp.eq.s32.totalorder %s14, 1
    %p84 = por %p82, %p83
    %p86 = scmp.ne.s32.totalorder %s69, %s85
    %p87 = scmp.eq.s32.totalorder %s14, 0
    %p88 = por %p86, %p87
    %p89 = scmp.le.s32.totalorder 1, %s8
    %p90 = scmp.lt.s32.totalorder %s8, 3
    %p91 = pnand %p89, %p90
    %p92 = pneg %p91
    // Predicated region
    $region9: #{tpu_custom_call.1} parent=5 // pred_check
      _
    $region10: #{tpu_custom_call.1} parent=5 // pred_check_branch
      %94 = sbr.rel (%p91) target = $region12
    $region11: #{tpu_custom_call.1} parent=5 // pred_region
      %s95 = ssub.s32 %s8, 1
      // Predicated region
      $region13: #{tpu_custom_call.1} parent=11 // pred_check
        %p96 = pneg %p55
      $region14: #{tpu_custom_call.1} parent=11 // pred_check_branch
        %98 = sbr.rel (%p96) target = $region16
      $region15: #{tpu_custom_call.1} parent=11 // pred_region
        _
      $region16: #{tpu_custom_call.1} parent=11 // pred_fallthru
        _
    $region12: #{tpu_custom_call.1} parent=5 // pred_fallthru
      _
    %p99 = scmp.lt.s32.totalorder %s8, 2
    // Predicated region
    $region17: #{tpu_custom_call.1} parent=5 // pred_check
      %p100 = pneg %p99
    $region18: #{tpu_custom_call.1} parent=5 // pred_check_branch
      %102 = sbr.rel (%p100) target = $region20
    $region19: #{tpu_custom_call.1} parent=5 // pred_region
      // Predicated region
      $region21: #{tpu_custom_call.1} parent=19 // pred_check
        %p103 = pneg %p28
      $region22: #{tpu_custom_call.1} parent=19 // pred_check_branch
        %105 = sbr.rel (%p103) target = $region24
      $region23: #{tpu_custom_call.1} parent=19 // pred_region
        %p106 = scmp.lt.s32.totalorder %s8, 1
        %s107 = scalar_select %p106, %s8, 1
        %s108 = smul.addr %s107, 9
        %s109 = smul.addr %s108, 8
        %s110 = scalar_lea.vmem %s0, %s109
      $region24: #{tpu_custom_call.1} parent=19 // pred_fallthru
        _
    $region20: #{tpu_custom_call.1} parent=5 // pred_fallthru
      _
    %p111 = scmp.le.s32.totalorder 1, %s8
    %p112 = scmp.lt.s32.totalorder %s8, 3
    %p113 = pnand %p111, %p112
    %p114 = pneg %p113
    // Predicated region
    $region25: #{tpu_custom_call.1} parent=5 // pred_check
      _
    $region26: #{tpu_custom_call.1} parent=5 // pred_check_branch
      %116 = sbr.rel (%p113) target = $region28
    $region27: #{tpu_custom_call.1} parent=5 // pred_region
      %s117 = ssub.s32 %s8, 1
      %p118 = scmp.lt.s32.totalorder %s13, 1
      %s119 = scalar_select %p118, %s13, 1
      %s120 = smul.addr %s119, 9
      %s121 = smul.addr %s120, 8
      %s122 = scalar_lea.vmem %s0, %s121
      %p123 = pneg %p34
      %p124 = pneg %p31
      %p125 = pneg %p55
      %p126 = pneg %p52
      %p127 = pneg %p81
      %p128 = pneg %p78
      %p129 = scmp.lt.s32.totalorder %s13, 1
      %s130 = scalar_select %p129, %s13, 1
      %s131 = smul.addr %s130, 8
      %s132 = smul.addr %s131, 8
      %s133 = scalar_lea.vmem %s2, %s132
      %p134 = scmp.lt.s32.totalorder %s13, 1
      %s135 = scalar_select %p134, %s13, 1
      %s136 = smul.addr %s135, 9
      %s137 = smul.addr %s136, 8
      %s138 = scalar_lea.vmem %s0, %s137
      %p139 = scmp.lt.s32.totalorder %s13, 1
      %s140 = scalar_select %p139, %s13, 1
      %s141 = smul.addr %s140, 8
      %s142 = smul.addr %s141, 8
      %s143 = scalar_lea.vmem %s2, %s142
      %v144 = vld [vmem:[%s138] sm:$0xff]
      %v145 = vld [vmem:[%s138 + $0x8] sm:$0xff]
      %v146 = vld [vmem:[%s138 + $0x10] sm:$0xff]
      %v147 = vld [vmem:[%s138 + $0x18] sm:$0xff]
      %v148 = vld [vmem:[%s138 + $0x20] sm:$0xff]
      %v149 = vld [vmem:[%s138 + $0x28] sm:$0xff]
      %v150 = vld [vmem:[%s138 + $0x30] sm:$0xff]
      %v151 = vld [vmem:[%s138 + $0x38] sm:$0xff]
      %v152 = vld [vmem:[%s138 + $0x40] sm:$0x3]
      %v153 = vld [vmem:[%s1] sm:$0xf]
      %s154 = scalar_lea.vmem %s1, 4
      %v155 = vld [vmem:[%s154] sm:$0xf]
      %vm165 = vcmask 1046528
      %v166 = vrot.slane %v144, 1
      %v167 = vrot.slane %v145, 1
      %v168 = vsel %vm165, %v166, %v167
      %v169 = vrot.slane %v146, 1
      %v170 = vsel %vm165, %v167, %v169
      %v171 = vrot.slane %v147, 1
      %v172 = vsel %vm165, %v169, %v171
      %v173 = vrot.slane %v148, 1
      %v174 = vsel %vm165, %v171, %v173
      %v175 = vrot.slane %v149, 1
      %v176 = vsel %vm165, %v173, %v175
      %v177 = vrot.slane %v150, 1
      %v178 = vsel %vm165, %v175, %v177
      %v179 = vrot.slane %v151, 1
      %v180 = vsel %vm165, %v177, %v179
      %v181 = vrot.slane %v152, 1
      %v182 = vsel %vm165, %v179, %v181
      %vm183 = vcmask 31744
      %v184 = vsel %vm183, %v168, 0
      %v186 = vsel %vm183, %v170, 0
      %v188 = vsel %vm183, %v172, 0
      %v190 = vsel %vm183, %v174, 0
      %v192 = vsel %vm183, %v176, 0
      %v194 = vsel %vm183, %v178, 0
      %v196 = vsel %vm183, %v180, 0
      %v198 = vsel %vm183, %v182, 0
      %vm200 = vcmask 1043456
      %v202 = vsel %vm200, %v155, 0
      %204 = vmatpush.msra.mxu0 0.0
      %205 = vmatpush.msra.mxu0 0.0
      %206 = vmatpush.msra.mxu0 0.0
      %207 = vmatpush.msra.mxu0 0.0
      %208 = vmatpush.msra.mxu0 0.0
      %209 = vmatpush.msra.mxu0 0.0
      %210 = vmatpush.msra.mxu0 0.0
      %211 = vmatpush.msra.mxu0 0.0
      %212 = vmatpush.msra.mxu0 0.0
      %213 = vmatpush.msra.mxu0 0.0
      %214 = vmatpush.msra.mxu0 0.0
      %215 = vmatpush.msra.mxu0 0.0
      %216 = vmatpush.msra.mxu0 0.0
      %217 = vmatpush.msra.mxu0 0.0
      %218 = vmatpush.msra.mxu0 0.0
      %219 = vmatpush.msra.mxu0 %v202
      %220 = vmatmul.f32.gmra.mxu0 %v184
      %v221 = vpop.f32.mrf.mxu0
      %v222 = vadd.f32 0.0, %v221
      %223 = vmatmul.f32.gmra.mxu0 %v186
      %v224 = vpop.f32.mrf.mxu0
      %v225 = vadd.f32 0.0, %v224
      %226 = vmatmul.f32.gmra.mxu0 %v188
      %v227 = vpop.f32.mrf.mxu0
      %v228 = vadd.f32 0.0, %v227
      %229 = vmatmul.f32.gmra.mxu0 %v190
      %v230 = vpop.f32.mrf.mxu0
      %v231 = vadd.f32 0.0, %v230
      %232 = vmatmul.f32.gmra.mxu0 %v192
      %v233 = vpop.f32.mrf.mxu0
      %v234 = vadd.f32 0.0, %v233
      %235 = vmatmul.f32.gmra.mxu0 %v194
      %v236 = vpop.f32.mrf.mxu0
      %v237 = vadd.f32 0.0, %v236
      %238 = vmatmul.f32.gmra.mxu0 %v196
      %v239 = vpop.f32.mrf.mxu0
      %v240 = vadd.f32 0.0, %v239
      %241 = vmatmul.f32.gmra.mxu0 %v198
      %v242 = vpop.f32.mrf.mxu0
      %v243 = vadd.f32 0.0, %v242
      %244 = vdwg.mxu0
      %v245 = vsel %vm183, %v144, 0
      %v247 = vsel %vm183, %v145, 0
      %v249 = vsel %vm183, %v146, 0
      %v251 = vsel %vm183, %v147, 0
      %v253 = vsel %vm183, %v148, 0
      %v255 = vsel %vm183, %v149, 0
      %v257 = vsel %vm183, %v150, 0
      %v259 = vsel %vm183, %v151, 0
      %v262 = vsel %vm200, %v153, 0
      %264 = vmatpush.msra.mxu0 0.0
      %265 = vmatpush.msra.mxu0 0.0
      %266 = vmatpush.msra.mxu0 0.0
      %267 = vmatpush.msra.mxu0 0.0
      %268 = vmatpush.msra.mxu0 0.0
      %269 = vmatpush.msra.mxu0 0.0
      %270 = vmatpush.msra.mxu0 0.0
      %271 = vmatpush.msra.mxu0 0.0
      %272 = vmatpush.msra.mxu0 0.0
      %273 = vmatpush.msra.mxu0 0.0
      %274 = vmatpush.msra.mxu0 0.0
      %275 = vmatpush.msra.mxu0 0.0
      %276 = vmatpush.msra.mxu0 0.0
      %277 = vmatpush.msra.mxu0 0.0
      %278 = vmatpush.msra.mxu0 0.0
      %279 = vmatpush.msra.mxu0 %v262
      %280 = vmatmul.f32.gmra.mxu0 %v245
      %v281 = vpop.f32.mrf.mxu0
      %v282 = vadd.f32 %v222, %v281
      %283 = vmatmul.f32.gmra.mxu0 %v247
      %v284 = vpop.f32.mrf.mxu0
      %v285 = vadd.f32 %v225, %v284
      %286 = vmatmul.f32.gmra.mxu0 %v249
      %v287 = vpop.f32.mrf.mxu0
      %v288 = vadd.f32 %v228, %v287
      %289 = vmatmul.f32.gmra.mxu0 %v251
      %v290 = vpop.f32.mrf.mxu0
      %v291 = vadd.f32 %v231, %v290
      %292 = vmatmul.f32.gmra.mxu0 %v253
      %v293 = vpop.f32.mrf.mxu0
      %v294 = vadd.f32 %v234, %v293
      %295 = vmatmul.f32.gmra.mxu0 %v255
      %v296 = vpop.f32.mrf.mxu0
      %v297 = vadd.f32 %v237, %v296
      %298 = vmatmul.f32.gmra.mxu0 %v257
      %v299 = vpop.f32.mrf.mxu0
      %v300 = vadd.f32 %v240, %v299
      %301 = vmatmul.f32.gmra.mxu0 %v259
      %v302 = vpop.f32.mrf.mxu0
      %v303 = vadd.f32 %v243, %v302
      %304 = vdwg.mxu0
      %s305 = scalar_lea.vmem %s1, 8
      %v306 = vld [vmem:[%s305] sm:$0xf]
      %vm307 = vcmask 1045504
      %v308 = vrot.slane %v144, 2
      %v309 = vrot.slane %v145, 2
      %v310 = vsel %vm307, %v308, %v309
      %v311 = vrot.slane %v146, 2
      %v312 = vsel %vm307, %v309, %v311
      %v313 = vrot.slane %v147, 2
      %v314 = vsel %vm307, %v311, %v313
      %v315 = vrot.slane %v148, 2
      %v316 = vsel %vm307, %v313, %v315
      %v317 = vrot.slane %v149, 2
      %v318 = vsel %vm307, %v315, %v317
      %v319 = vrot.slane %v150, 2
      %v320 = vsel %vm307, %v317, %v319
      %v321 = vrot.slane %v151, 2
      %v322 = vsel %vm307, %v319, %v321
      %v323 = vrot.slane %v152, 2
      %v324 = vsel %vm307, %v321, %v323
      %v325 = vsel %vm183, %v310, 0
      %v327 = vsel %vm183, %v312, 0
      %v329 = vsel %vm183, %v314, 0
      %v331 = vsel %vm183, %v316, 0
      %v333 = vsel %vm183, %v318, 0
      %v335 = vsel %vm183, %v320, 0
      %v337 = vsel %vm183, %v322, 0
      %v339 = vsel %vm183, %v324, 0
      %v342 = vsel %vm200, %v306, 0
      %344 = vmatpush.msra.mxu0 0.0
      %345 = vmatpush.msra.mxu0 0.0
      %346 = vmatpush.msra.mxu0 0.0
      %347 = vmatpush.msra.mxu0 0.0
      %348 = vmatpush.msra.mxu0 0.0
      %349 = vmatpush.msra.mxu0 0.0
      %350 = vmatpush.msra.mxu0 0.0
      %351 = vmatpush.msra.mxu0 0.0
      %352 = vmatpush.msra.mxu0 0.0
      %353 = vmatpush.msra.mxu0 0.0
      %354 = vmatpush.msra.mxu0 0.0
      %355 = vmatpush.msra.mxu0 0.0
      %356 = vmatpush.msra.mxu0 0.0
      %357 = vmatpush.msra.mxu0 0.0
      %358 = vmatpush.msra.mxu0 0.0
      %359 = vmatpush.msra.mxu0 %v342
      %360 = vmatmul.f32.gmra.mxu0 %v325
      %v361 = vpop.f32.mrf.mxu0
      %v362 = vadd.f32 0.0, %v361
      %363 = vmatmul.f32.gmra.mxu0 %v327
      %v364 = vpop.f32.mrf.mxu0
      %v365 = vadd.f32 0.0, %v364
      %366 = vmatmul.f32.gmra.mxu0 %v329
      %v367 = vpop.f32.mrf.mxu0
      %v368 = vadd.f32 0.0, %v367
      %369 = vmatmul.f32.gmra.mxu0 %v331
      %v370 = vpop.f32.mrf.mxu0
      %v371 = vadd.f32 0.0, %v370
      %372 = vmatmul.f32.gmra.mxu0 %v333
      %v373 = vpop.f32.mrf.mxu0
      %v374 = vadd.f32 0.0, %v373
      %375 = vmatmul.f32.gmra.mxu0 %v335
      %v376 = vpop.f32.mrf.mxu0
      %v377 = vadd.f32 0.0, %v376
      %378 = vmatmul.f32.gmra.mxu0 %v337
      %v379 = vpop.f32.mrf.mxu0
      %v380 = vadd.f32 0.0, %v379
      %381 = vmatmul.f32.gmra.mxu0 %v339
      %v382 = vpop.f32.mrf.mxu0
      %v383 = vadd.f32 0.0, %v382
      %384 = vdwg.mxu0
      %v385 = vadd.f32 %v282, %v362
      %v386 = vadd.f32 %v285, %v365
      %v387 = vadd.f32 %v288, %v368
      %v388 = vadd.f32 %v291, %v371
      %v389 = vadd.f32 %v294, %v374
      %v390 = vadd.f32 %v297, %v377
      %v391 = vadd.f32 %v300, %v380
      %v392 = vadd.f32 %v303, %v383
      %vm393 = vcmp.ge.f32.partialorder %v385, 0.0
      %vm394 = vcmp.ge.f32.partialorder %v386, 0.0
      %vm395 = vcmp.ge.f32.partialorder %v387, 0.0
      %vm396 = vcmp.ge.f32.partialorder %v388, 0.0
      %vm397 = vcmp.ge.f32.partialorder %v389, 0.0
      %vm398 = vcmp.ge.f32.partialorder %v390, 0.0
      %vm399 = vcmp.ge.f32.partialorder %v391, 0.0
      %vm400 = vcmp.ge.f32.partialorder %v392, 0.0
      %v401 = vmul.f32 %v385, 0.1
      %v402 = vmul.f32 %v386, 0.1
      %v403 = vmul.f32 %v387, 0.1
      %v404 = vmul.f32 %v388, 0.1
      %v405 = vmul.f32 %v389, 0.1
      %v406 = vmul.f32 %v390, 0.1
      %v407 = vmul.f32 %v391, 0.1
      %v408 = vmul.f32 %v392, 0.1
      %v409 = vsel %vm393, %v385, %v401
      %v410 = vsel %vm394, %v386, %v402
      %v411 = vsel %vm395, %v387, %v403
      %v412 = vsel %vm396, %v388, %v404
      %v413 = vsel %vm397, %v389, %v405
      %v414 = vsel %vm398, %v390, %v406
      %v415 = vsel %vm399, %v391, %v407
      %v416 = vsel %vm400, %v392, %v408
      %vm417 = vcmask 261120
      %418 = vst.msk [vmem:[%s143] sm:$0xff] %vm417, %v409
      %419 = vst.msk [vmem:[%s143 + $0x8] sm:$0xff] %vm417, %v410
      %420 = vst.msk [vmem:[%s143 + $0x10] sm:$0xff] %vm417, %v411
      %421 = vst.msk [vmem:[%s143 + $0x18] sm:$0xff] %vm417, %v412
      %422 = vst.msk [vmem:[%s143 + $0x20] sm:$0xff] %vm417, %v413
      %423 = vst.msk [vmem:[%s143 + $0x28] sm:$0xff] %vm417, %v414
      %424 = vst.msk [vmem:[%s143 + $0x30] sm:$0xff] %vm417, %v415
      %425 = vst.msk [vmem:[%s143 + $0x38] sm:$0xff] %vm417, %v416
      %p426 = scmp.lt.s32.totalorder %s13, 1
      %s427 = scalar_select %p426, %s13, 1
      %s428 = smul.addr %s427, 8
      %s429 = smul.addr %s428, 8
      %s430 = scalar_lea.vmem %s2, %s429
      // Predicated region
      $region29: #{tpu_custom_call.1} parent=27 // pred_check
        %p431 = pneg %p78
      $region30: #{tpu_custom_call.1} parent=27 // pred_check_branch
        %433 = sbr.rel (%p431) target = $region32
      $region31: #{tpu_custom_call.1} parent=27 // pred_region
        _
      $region32: #{tpu_custom_call.1} parent=27 // pred_fallthru
        _
    $region28: #{tpu_custom_call.1} parent=5 // pred_fallthru
      _
    %p434 = scmp.le.s32.totalorder 2, %s8
    // Predicated region
    $region33: #{tpu_custom_call.1} parent=5 // pred_check
      %p435 = pneg %p434
    $region34: #{tpu_custom_call.1} parent=5 // pred_check_branch
      %437 = sbr.rel (%p435) target = $region36
    $region35: #{tpu_custom_call.1} parent=5 // pred_region
      %s438 = ssub.s32 %s8, 2
      // Predicated region
      $region37: #{tpu_custom_call.1} parent=35 // pred_check
        %p439 = pneg %p84
      $region38: #{tpu_custom_call.1} parent=35 // pred_check_branch
        %441 = sbr.rel (%p439) target = $region40
      $region39: #{tpu_custom_call.1} parent=35 // pred_region
        %p442 = scmp.lt.s32.totalorder %s14, 1
        %s443 = scalar_select %p442, %s14, 1
        %s444 = smul.addr %s443, 8
        %s445 = smul.addr %s444, 8
        %s446 = scalar_lea.vmem %s2, %s445
      $region40: #{tpu_custom_call.1} parent=35 // pred_fallthru
        _
    $region36: #{tpu_custom_call.1} parent=5 // pred_fallthru
      _
  $region6: #{tpu_custom_call.1} parent=0 // loop_footer
    %s12 = sadd.s32 1, %s8
  $region7: #{tpu_custom_call.1} parent=0 // loop_footer_branch
    %7 = sbr.rel target = $region3
  $region8: #{tpu_custom_call.1} parent=0 // loop_exit
    _

</llo_original>
